<compile_context>
chip_gen: v5e
topology: v5e:2x2
jax: 0.10.0
libtpu: 0.0.40
codegen_flags: <defaults>
</compile_context>

<pallas_src>
import math

import jax
import jax.numpy as jnp
from jax import lax
from jax.experimental import pallas as pl
from jax.experimental.pallas import tpu as pltpu

FEAT = 70  # fixed by the module's theta2 = Parameter(FloatTensor(70, 70))


def _make_kernel(mm_dtype):
    def kernel(p_ref, f_ref, h_ref, a_ref, theta_ref, o_ref):
        # Blocks per grid step:
        #   p_ref / f_ref / a_ref : (B, row, row)   f32
        #   h_ref                 : (B, row, feat)  f32   (feat un-padded)
        #   theta_ref             : (feat, FP)      mm_dtype (resident)
        #   o_ref                 : (B, row, FP)    out dtype (lane-dense)
        a = a_ref[...]                                          # (B, row, row)
        d = lax.rsqrt(jnp.sum(a, axis=-1, keepdims=True))       # (B, row, 1) == D1**-0.5

        pf = p_ref[...] * f_ref[...]                            # (B, row, row)
        h_scaled = d * h_ref[...]                               # D @ H  (row scaling, f32)

        # PF @ (D @ H), batched over the samples in this block (MXU,
        # bf16 operands / f32 accumulation).
        tmp = jnp.einsum(
            "bij,bjf->bif",
            pf.astype(mm_dtype), h_scaled.astype(mm_dtype),
            preferred_element_type=jnp.float32)                 # (B, row, feat)
        tmp = d * tmp                                           # D @ (...)  (f32 row scaling)

        # Single fused theta matmul across the whole batch block.
        B, R, K = tmp.shape
        out = jnp.dot(tmp.reshape(B * R, K).astype(mm_dtype), theta_ref[...],
                      preferred_element_type=jnp.float32)       # (B*row, FP)
        FP = out.shape[-1]
        o_ref[...] = jnp.maximum(out, 0.0).reshape(B, R, FP).astype(o_ref.dtype)

    return kernel


def preference_fuzzy_conv(P, F, H, A, theta2, *, block_b=256,
                          matmul_dtype=jnp.bfloat16, out_dtype=jnp.float32):
    num, row, feat = H.shape
    assert theta2.shape == (feat, feat)
    assert P.shape == (num, row, row)
    assert F.shape == (num, row, row)
    assert A.shape == (num, row, row)

    # Lane-dense output: pad only theta2's columns to a 128-multiple (its rows
    # stay K=feat, and H stays un-padded on the host).  Extra output columns
    # are exact zeros and are sliced off below.
    FP = ((feat + 127) // 128) * 128
    theta_p = jnp.pad(theta2.astype(jnp.float32),
                      ((0, 0), (0, FP - feat))).astype(matmul_dtype)

    # Batch block: large (MiB-scale DMAs, big-M theta matmul), but keep the
    # grid length >= 2 when possible so dual-TC parts (v7x) can shard steps.
    B = max(1, min(block_b, num))
    if num > 1 and pl.cdiv(num, B) < 2:
        B = pl.cdiv(num, 2)
    grid_n = pl.cdiv(num, B)
    # No host-side batch-remainder padding: Pallas clamps the trailing partial
    # block's DMAs to the array bounds; over-read rows produce at worst NaN in
    # rows that are never written back.

    def blk(last):
        return pl.BlockSpec((B, row, last), lambda n: (n, 0, 0))

    out = pl.pallas_call(
        _make_kernel(matmul_dtype),
        out_shape=jax.ShapeDtypeStruct((num, row, FP), out_dtype),
        grid_spec=pltpu.PrefetchScalarGridSpec(
            num_scalar_prefetch=0,
            grid=(grid_n,),
            in_specs=[
                blk(row),                                    # P
                blk(row),                                    # F
                blk(feat),                                   # H (un-padded feature dim)
                blk(row),                                    # A
                pl.BlockSpec((feat, FP), lambda n: (0, 0)),  # theta2 (resident)
            ],
            out_specs=blk(FP),
        ),
        compiler_params=pltpu.CompilerParams(
            dimension_semantics=("parallel",),
            vmem_limit_bytes=32 * 1024 * 1024,
        ),
    )(P, F, H, A, theta_p)

    # TODO(synk): this :feat slice is one extra HBM pass over the output; it is
    # kept so the in-kernel stores stay lane-dense (128 wide) as recommended.
    return out[:, :, :feat]


def _reference(P, F, H, A, theta2):
    d = jnp.sum(A, axis=-1) ** -0.5                     # (num, row)
    D = jax.vmap(jnp.diag)(d)                           # (num, row, row)
    PF = P * F
    h1 = D @ PF @ D @ H @ theta2
    return jnp.maximum(h1, 0.0)


def _make_inputs(key, num, row):
    kP, kF, kH, kA, kT = jax.random.split(key, 5)
    P = jax.random.normal(kP, (num, row, row), dtype=jnp.float32)
    F = jax.random.normal(kF, (num, row, row), dtype=jnp.float32)
    H = jax.random.normal(kH, (num, row, FEAT), dtype=jnp.float32)
    # A row sums must be positive for D1 ** -0.5 to be finite (adjacency-like)
    A = jax.random.uniform(kA, (num, row, row), dtype=jnp.float32,
                           minval=0.1, maxval=1.0)
    # reset_parameters(): uniform(-stdv, stdv), stdv = 1/sqrt(70)
    stdv = 1.0 / math.sqrt(FEAT)
    theta2 = jax.random.uniform(kT, (FEAT, FEAT), dtype=jnp.float32,
                                minval=-stdv, maxval=stdv)
    return P, F, H, A, theta2


if __name__ == "__main__":
    key = jax.random.PRNGKey(0)
    keys = jax.random.split(key, 3)

    # Case 1: module-scale usage (tiny batch -> B auto-shrinks, grid of 2).
    # Case 2: num not a multiple of the block (partial trailing block).
    # Case 3: larger batch exercising the big-block / two-step grid path.
    cases = [(2, 8), (11, 8), (300, 8)]
    for k, (num, row) in zip(keys, cases):
        P, F, H, A, theta2 = _make_inputs(k, num=num, row=row)
        out = jax.block_until_ready(preference_fuzzy_conv(P, F, H, A, theta2))
        ref = _reference(P, F, H, A, theta2)
        assert out.shape == (num, row, FEAT)
        # bf16 matmul operands (f32 accumulation) -> relaxed tolerance
        assert jnp.allclose(out, ref, rtol=2e-2, atol=2e-2), \
            f"mismatch vs reference (num={num}, row={row})"

    print("KERNEL_OK")
</pallas_src>

<mosaic_0001>
module attributes {stable_mosaic.version = 11 : i64} {
  func.func @kernel(%arg0: i32, %arg1: memref<1x8x8xf32, #tpu.memory_space<vmem>>, %arg2: memref<1x8x8xf32, #tpu.memory_space<vmem>>, %arg3: memref<1x8x70xf32, #tpu.memory_space<vmem>>, %arg4: memref<1x8x8xf32, #tpu.memory_space<vmem>>, %arg5: memref<70x128xbf16, #tpu.memory_space<vmem>>, %arg6: memref<1x8x128xf32, #tpu.memory_space<vmem>>) attributes {dimension_semantics = [#tpu.dimension_semantics<parallel>], iteration_bounds = array<i64: 2>, scalar_prefetch = 0 : i64, scratch_operands = 0 : i64, tpu.core_type = #tpu.core_type<tc>, window_params = [{transform_indices = @transform_0, window_bounds = array<i64: 1, 8, 8>}, {transform_indices = @transform_1, window_bounds = array<i64: 1, 8, 8>}, {transform_indices = @transform_2, window_bounds = array<i64: 1, 8, 70>}, {transform_indices = @transform_3, window_bounds = array<i64: 1, 8, 8>}, {pipeline_mode = #tpu.pipeline_mode<synchronous>, transform_indices = @transform_4, window_bounds = array<i64: 70, 128>}, {transform_indices = @transform_5, window_bounds = array<i64: 1, 8, 128>}]} {
    %c0 = arith.constant 0 : index
    %c0_0 = arith.constant 0 : index
    %c0_1 = arith.constant 0 : index
    %0 = vector.load %arg4[%c0, %c0_0, %c0_1] : memref<1x8x8xf32, #tpu.memory_space<vmem>>, vector<1x8x8xf32>
    %cst = arith.constant dense<0.000000e+00> : vector<1x8xf32>
    %1 = vector.multi_reduction <add>, %0, %cst [2] : vector<1x8x8xf32> to vector<1x8xf32>
    %2 = vector.shape_cast %1 : vector<1x8xf32> to vector<1x8x1xf32>
    %3 = math.rsqrt %2 : vector<1x8x1xf32>
    %c0_2 = arith.constant 0 : index
    %c0_3 = arith.constant 0 : index
    %c0_4 = arith.constant 0 : index
    %4 = vector.load %arg1[%c0_2, %c0_3, %c0_4] : memref<1x8x8xf32, #tpu.memory_space<vmem>>, vector<1x8x8xf32>
    %c0_5 = arith.constant 0 : index
    %c0_6 = arith.constant 0 : index
    %c0_7 = arith.constant 0 : index
    %5 = vector.load %arg2[%c0_5, %c0_6, %c0_7] : memref<1x8x8xf32, #tpu.memory_space<vmem>>, vector<1x8x8xf32>
    %6 = arith.mulf %4, %5 : vector<1x8x8xf32>
    %c0_8 = arith.constant 0 : index
    %c0_9 = arith.constant 0 : index
    %c0_10 = arith.constant 0 : index
    %7 = vector.load %arg3[%c0_8, %c0_9, %c0_10] : memref<1x8x70xf32, #tpu.memory_space<vmem>>, vector<1x8x70xf32>
    %8 = vector.broadcast %3 : vector<1x8x1xf32> to vector<1x8x70xf32>
    %9 = arith.mulf %8, %7 : vector<1x8x70xf32>
    %10 = arith.truncf %6 : vector<1x8x8xf32> to vector<1x8x8xbf16>
    %11 = arith.truncf %9 : vector<1x8x70xf32> to vector<1x8x70xbf16>
    "tpu.trace_start"() <{level = 10 : i32, message = "bij,bjf->bif"}> : () -> ()
    %cst_11 = arith.constant dense<0.000000e+00> : vector<1x8x70xf32>
    %12 = tpu.matmul %10, %11, %cst_11 {dimension_numbers = #tpu.dot_dimension_numbers<[2], [1], [1], [2], [0, 0, 0, 1, 1, 2], [0], [0]>} : vector<1x8x8xbf16>, vector<1x8x70xbf16>, vector<1x8x70xf32> -> vector<1x8x70xf32>
    "tpu.trace_stop"() : () -> ()
    %13 = vector.broadcast %3 : vector<1x8x1xf32> to vector<1x8x70xf32>
    %14 = arith.mulf %13, %12 : vector<1x8x70xf32>
    %15 = vector.shape_cast %14 : vector<1x8x70xf32> to vector<8x70xf32>
    %16 = arith.truncf %15 : vector<8x70xf32> to vector<8x70xbf16>
    %c0_12 = arith.constant 0 : index
    %c0_13 = arith.constant 0 : index
    %17 = vector.load %arg5[%c0_12, %c0_13] : memref<70x128xbf16, #tpu.memory_space<vmem>>, vector<70x128xbf16>
    %cst_14 = arith.constant dense<0.000000e+00> : vector<8x128xf32>
    %18 = tpu.matmul %16, %17, %cst_14 {dimension_numbers = #tpu.dot_dimension_numbers<[1], [0], [0], [1], [0, 0, 1, 1], [], []>} : vector<8x70xbf16>, vector<70x128xbf16>, vector<8x128xf32> -> vector<8x128xf32>
    %cst_15 = arith.constant 0.000000e+00 : f32
    %19 = vector.broadcast %cst_15 : f32 to vector<8x128xf32>
    %20 = arith.maximumf %18, %19 : vector<8x128xf32>
    %21 = vector.shape_cast %20 : vector<8x128xf32> to vector<1x8x128xf32>
    %c0_16 = arith.constant 0 : index
    %c0_17 = arith.constant 0 : index
    %c0_18 = arith.constant 0 : index
    %22 = vector.load %arg6[%c0_16, %c0_17, %c0_18] : memref<1x8x128xf32, #tpu.memory_space<vmem>>, vector<1x8x128xf32>
    tpu.vector_store %arg6[%c0_16, %c0_17, %c0_18], %21 {strides = array<i32>} : memref<1x8x128xf32, #tpu.memory_space<vmem>>, vector<1x8x128xf32>,
    return
  }
  func.func @transform_0(%arg0: i32) -> (i32, i32, i32) {
    %c0_i32 = arith.constant 0 : i32
    %c0_i32_0 = arith.constant 0 : i32
    %c0_i32_1 = arith.constant 0 : i32
    return %arg0, %c0_i32, %c0_i32_0 : i32, i32, i32
  }
  func.func @transform_1(%arg0: i32) -> (i32, i32, i32) {
    %c0_i32 = arith.constant 0 : i32
    %c0_i32_0 = arith.constant 0 : i32
    %c0_i32_1 = arith.constant 0 : i32
    return %arg0, %c0_i32, %c0_i32_0 : i32, i32, i32
  }
  func.func @transform_2(%arg0: i32) -> (i32, i32, i32) {
    %c0_i32 = arith.constant 0 : i32
    %c0_i32_0 = arith.constant 0 : i32
    %c0_i32_1 = arith.constant 0 : i32
    return %arg0, %c0_i32, %c0_i32_0 : i32, i32, i32
  }
  func.func @transform_3(%arg0: i32) -> (i32, i32, i32) {
    %c0_i32 = arith.constant 0 : i32
    %c0_i32_0 = arith.constant 0 : i32
    %c0_i32_1 = arith.constant 0 : i32
    return %arg0, %c0_i32, %c0_i32_0 : i32, i32, i32
  }
  func.func @transform_4(%arg0: i32) -> (i32, i32) {
    %c0_i32 = arith.constant 0 : i32
    %c0_i32_0 = arith.constant 0 : i32
    %c0_i32_1 = arith.constant 0 : i32
    return %c0_i32, %c0_i32_0 : i32, i32
  }
  func.func @transform_5(%arg0: i32) -> (i32, i32, i32) {
    %c0_i32 = arith.constant 0 : i32
    %c0_i32_0 = arith.constant 0 : i32
    %c0_i32_1 = arith.constant 0 : i32
    return %arg0, %c0_i32, %c0_i32_0 : i32, i32, i32
  }
}

</mosaic_0001>

<llo_original>
// kernel: tpu_custom_call.1
$region0: #{tpu_custom_call.1}
  #allocation0 [shape = 'u32[]', space=smem, size = 0x4, offset = 0x4, fixed_abs, tag = 'smem constant byte address 0x4 - core index']
  #allocation1 [shape = 'u32[72,128]{1,0:T(1,128)}', space=vmem, size = 0x9000, scoped, tag = 'internal scratch']
  %s0 = inlined_call_operand.hbm [shape: f32[2,8,8], index: 0, kind: input, shape index: {}]
  %s1 = inlined_call_operand.hbm [shape: f32[2,8,8], index: 1, kind: input, shape index: {}]
  %s2 = inlined_call_operand.hbm [shape: f32[2,8,70], index: 2, kind: input, shape index: {}]
  %s3 = inlined_call_operand.hbm [shape: f32[2,8,8], index: 3, kind: input, shape index: {}]
  %s4 = inlined_call_operand.hbm [shape: bf16[70,128], index: 4, kind: input, shape index: {}]
  %s5 = inlined_call_operand.hbm [shape: f32[2,8,128], index: 5, kind: output, shape index: {}]
  %s6 = sld [smem:[#allocation0]]
  $region73: #{tpu_custom_call.1} parent=0
    _
  %s8 = ssub.s32 1, %s6
  %s9 = scalar_select 0, %s8, %s6
  $region1: #{tpu_custom_call.1} parent=0
    #allocation2 [shape = 'u8[8192]{0}', space=vmem, size = 0x2000, scoped, tag = 'input window, operand 0']
    #allocation3 [shape = 's32[2]{0}', space=sflag, size = 0x8, scoped, tag = 'scoped memory for tpu_custom_call.1']
    #allocation4 [shape = 's32[2]{0}', space=sflag, size = 0x8, scoped, tag = 'scoped memory for tpu_custom_call.1']
    #allocation5 [shape = 'u8[8192]{0}', space=vmem, size = 0x2000, scoped, tag = 'input window, operand 1']
    #allocation6 [shape = 's32[2]{0}', space=sflag, size = 0x8, scoped, tag = 'scoped memory for tpu_custom_call.1']
    #allocation7 [shape = 'u8[8192]{0}', space=vmem, size = 0x2000, scoped, tag = 'input window, operand 2']
    #allocation8 [shape = 'u8[8192]{0}', space=vmem, size = 0x2000, scoped, tag = 'input window, operand 3']
    #allocation9 [shape = 's32[2]{0}', space=sflag, size = 0x8, scoped, tag = 'scoped memory for tpu_custom_call.1']
    #allocation10 [shape = 'u8[18432]{0}', space=vmem, size = 0x4800, scoped, tag = 'input window, operand 4, single buffered']
    #allocation11 [shape = 'u8[8192]{0}', space=vmem, size = 0x2000, scoped, tag = 'output window, operand 0']
    %10 = vsyncpa [#allocation3], 0
    %s11 = scalar_lea.sflag [#allocation3], 1
    %12 = vsyncpa %s11, 0
    %13 = vsyncpa [#allocation6], 0
    %s14 = scalar_lea.sflag [#allocation6], 1
    %15 = vsyncpa %s14, 0
    %16 = vsyncpa [#allocation9], 0
    %s17 = scalar_lea.sflag [#allocation9], 1
    %18 = vsyncpa %s17, 0
    %19 = vsyncpa [#allocation4], 0
    %s20 = scalar_lea.sflag [#allocation4], 1
    %21 = vsyncpa %s20, 0
    loop: start=0, step=1, limit=4
    $region2: #{tpu_custom_call.1} parent=1 // loop_pre_header
      _
    $region3: #{tpu_custom_call.1} parent=1 // loop_header
      %s23 = sphi 0, %s27
      %p24 = scmp.ge.s32.totalorder %s23, 4
      %s33 = sphi 0, %s35
      %s36 = sphi 0, %s33
      %s37 = sphi 0, %s36
      %s53 = sphi 0, %s37
      %s59 = sphi 0, %s61
      %s62 = sphi 0, %s59
      %s63 = sphi 0, %s62
      %s79 = sphi 0, %s63
      %s85 = sphi 0, %s87
      %s88 = sphi 0, %s85
      %s89 = sphi 0, %s88
      %s105 = sphi 0, %s89
      %s111 = sphi 0, %s113
      %s114 = sphi 0, %s111
      %s115 = sphi 0, %s114
      %s131 = sphi 0, %s115
      %s135 = sphi 0, %s135
      %s137 = sphi 0, %s135
      %s138 = sphi 0, %s137
      %s152 = sphi 0, %s138
      %s158 = sphi 0, %s160
      %s161 = sphi 0, %s158
      %s162 = sphi 0, %s161
      %s178 = sphi 0, %s162
    $region4: #{tpu_custom_call.1} parent=1 // loop_header_branch
      %26 = sbr.rel (%p24) target = $region8
    $region5: #{tpu_custom_call.1} parent=1 // loop_body
      %s28 = ssub.s32 %s23, 1
      %s29 = ssub.s32 %s23, 2
      %s30 = sadd.s32 %s23, 1
      %s31 = ssub.s32 %s23, %s30
      %p32 = scmp.eq.s32.totalorder %s31, 0
      %s34 = sadd.s32 %s33, 1
      %s35 = scalar_select %p32, %s33, %s34
      %p38 = pneg %p32
      %p39 = scmp.eq.s32.totalorder %s23, 1
      %p40 = por %p38, %p39
      %p41 = scmp.ne.s32.totalorder %s33, %s36
      %p42 = scmp.eq.s32.totalorder %s23, 0
      %p43 = por %p41, %p42
      %p44 = scmp.ne.s32.totalorder %s33, %s36
      %p45 = scmp.eq.s32.totalorder %s28, 1
      %p46 = por %p44, %p45
      %p47 = scmp.ne.s32.totalorder %s36, %s37
      %p48 = scmp.eq.s32.totalorder %s28, 0
      %p49 = por %p47, %p48
      %p50 = scmp.ne.s32.totalorder %s36, %s37
      %p51 = scmp.eq.s32.totalorder %s29, 1
      %p52 = por %p50, %p51
      %p54 = scmp.ne.s32.totalorder %s37, %s53
      %p55 = scmp.eq.s32.totalorder %s29, 0
      %p56 = por %p54, %p55
      %s57 = ssub.s32 %s23, %s30
      %p58 = scmp.eq.s32.totalorder %s57, 0
      %s60 = sadd.s32 %s59, 1
      %s61 = scalar_select %p58, %s59, %s60
      %p64 = pneg %p58
      %p65 = scmp.eq.s32.totalorder %s23, 1
      %p66 = por %p64, %p65
      %p67 = scmp.ne.s32.totalorder %s59, %s62
      %p68 = scmp.eq.s32.totalorder %s23, 0
      %p69 = por %p67, %p68
      %p70 = scmp.ne.s32.totalorder %s59, %s62
      %p71 = scmp.eq.s32.totalorder %s28, 1
      %p72 = por %p70, %p71
      %p73 = scmp.ne.s32.totalorder %s62, %s63
      %p74 = scmp.eq.s32.totalorder %s28, 0
      %p75 = por %p73, %p74
      %p76 = scmp.ne.s32.totalorder %s62, %s63
      %p77 = scmp.eq.s32.totalorder %s29, 1
      %p78 = por %p76, %p77
      %p80 = scmp.ne.s32.totalorder %s63, %s79
      %p81 = scmp.eq.s32.totalorder %s29, 0
      %p82 = por %p80, %p81
      %s83 = ssub.s32 %s23, %s30
      %p84 = scmp.eq.s32.totalorder %s83, 0
      %s86 = sadd.s32 %s85, 1
      %s87 = scalar_select %p84, %s85, %s86
      %p90 = pneg %p84
      %p91 = scmp.eq.s32.totalorder %s23, 1
      %p92 = por %p90, %p91
      %p93 = scmp.ne.s32.totalorder %s85, %s88
      %p94 = scmp.eq.s32.totalorder %s23, 0
      %p95 = por %p93, %p94
      %p96 = scmp.ne.s32.totalorder %s85, %s88
      %p97 = scmp.eq.s32.totalorder %s28, 1
      %p98 = por %p96, %p97
      %p99 = scmp.ne.s32.totalorder %s88, %s89
      %p100 = scmp.eq.s32.totalorder %s28, 0
      %p101 = por %p99, %p100
      %p102 = scmp.ne.s32.totalorder %s88, %s89
      %p103 = scmp.eq.s32.totalorder %s29, 1
      %p104 = por %p102, %p103
      %p106 = scmp.ne.s32.totalorder %s89, %s105
      %p107 = scmp.eq.s32.totalorder %s29, 0
      %p108 = por %p106, %p107
      %s109 = ssub.s32 %s23, %s30
      %p110 = scmp.eq.s32.totalorder %s109, 0
      %s112 = sadd.s32 %s111, 1
      %s113 = scalar_select %p110, %s111, %s112
      %p116 = pneg %p110
      %p117 = scmp.eq.s32.totalorder %s23, 1
      %p118 = por %p116, %p117
      %p119 = scmp.ne.s32.totalorder %s111, %s114
      %p120 = scmp.eq.s32.totalorder %s23, 0
      %p121 = por %p119, %p120
      %p122 = scmp.ne.s32.totalorder %s111, %s114
      %p123 = scmp.eq.s32.totalorder %s28, 1
      %p124 = por %p122, %p123
      %p125 = scmp.ne.s32.totalorder %s114, %s115
      %p126 = scmp.eq.s32.totalorder %s28, 0
      %p127 = por %p125, %p126
      %p128 = scmp.ne.s32.totalorder %s114, %s115
      %p129 = scmp.eq.s32.totalorder %s29, 1
      %p130 = por %p128, %p129
      %p132 = scmp.ne.s32.totalorder %s115, %s131
      %p133 = scmp.eq.s32.totalorder %s29, 0
      %p134 = por %p132, %p133
      %s136 = sadd.s32 %s135, 1
      %p139 = scmp.eq.s32.totalorder %s23, 1
      %p140 = scmp.ne.s32.totalorder %s135, %s137
      %p141 = scmp.eq.s32.totalorder %s23, 0
      %p142 = por %p140, %p141
      %p143 = scmp.ne.s32.totalorder %s135, %s137
      %p144 = scmp.eq.s32.totalorder %s28, 1
      %p145 = por %p143, %p144
      %p146 = scmp.ne.s32.totalorder %s137, %s138
      %p147 = scmp.eq.s32.totalorder %s28, 0
      %p148 = por %p146, %p147
      %p149 = scmp.ne.s32.totalorder %s137, %s138
      %p150 = scmp.eq.s32.totalorder %s29, 1
      %p151 = por %p149, %p150
      %p153 = scmp.ne.s32.totalorder %s138, %s152
      %p154 = scmp.eq.s32.totalorder %s29, 0
      %p155 = por %p153, %p154
      %s156 = ssub.s32 %s23, %s30
      %p157 = scmp.eq.s32.totalorder %s156, 0
      %s159 = sadd.s32 %s158, 1
      %s160 = scalar_select %p157, %s158, %s159
      %p163 = pneg %p157
      %p164 = scmp.eq.s32.totalorder %s23, 1
      %p165 = por %p163, %p164
      %p166 = scmp.ne.s32.totalorder %s158, %s161
      %p167 = scmp.eq.s32.totalorder %s23, 0
      %p168 = por %p166, %p167
      %p169 = scmp.ne.s32.totalorder %s158, %s161
      %p170 = scmp.eq.s32.totalorder %s28, 1
      %p171 = por %p169, %p170
      %p172 = scmp.ne.s32.totalorder %s161, %s162
      %p173 = scmp.eq.s32.totalorder %s28, 0
      %p174 = por %p172, %p173
      %p175 = scmp.ne.s32.totalorder %s161, %s162
      %p176 = scmp.eq.s32.totalorder %s29, 1
      %p177 = por %p175, %p176
      %p179 = scmp.ne.s32.totalorder %s162, %s178
      %p180 = scmp.eq.s32.totalorder %s29, 0
      %p181 = por %p179, %p180
      %p182 = scmp.le.s32.totalorder 1, %s23
      %p183 = scmp.lt.s32.totalorder %s23, 3
      %p184 = pnand %p182, %p183
      %p185 = pneg %p184
      // Predicated region
      $region9: #{tpu_custom_call.1} parent=5 // pred_check
        _
      $region10: #{tpu_custom_call.1} parent=5 // pred_check_branch
        %187 = sbr.rel (%p184) target = $region12
      $region11: #{tpu_custom_call.1} parent=5 // pred_region
        %s188 = ssub.s32 %s23, 1
        // Predicated region
        $region13: #{tpu_custom_call.1} parent=11 // pred_check
          %p189 = pneg %p148
        $region14: #{tpu_custom_call.1} parent=11 // pred_check_branch
          %191 = sbr.rel (%p189) target = $region16
        $region15: #{tpu_custom_call.1} parent=11 // pred_region
          %193 = vsyncadd [#allocation9], 0
          %s194 = sshll.u32 %s4, 4
          %s195 = int_to_ptr.hbm [resolvable:$true] %s194
          %s196 = sshll.u32 [#allocation10], 4
          %s197 = int_to_ptr.vmem [resolvable:$true] %s196
          %202 = dma.hbm_to_vmem [thread:$0]  %s195, 576, %s197, [#allocation9], 64, 64, 4
        $region16: #{tpu_custom_call.1} parent=11 // pred_fallthru
          _
      $region12: #{tpu_custom_call.1} parent=5 // pred_fallthru
        _
      %p203 = scmp.lt.s32.totalorder %s23, 2
      // Predicated region
      $region17: #{tpu_custom_call.1} parent=5 // pred_check
        %p204 = pneg %p203
      $region18: #{tpu_custom_call.1} parent=5 // pred_check_branch
        %206 = sbr.rel (%p204) target = $region20
      $region19: #{tpu_custom_call.1} parent=5 // pred_region
        // Predicated region
        $region21: #{tpu_custom_call.1} parent=19 // pred_check
          %p207 = pneg %p43
        $region22: #{tpu_custom_call.1} parent=19 // pred_check_branch
          %209 = sbr.rel (%p207) target = $region24
        $region23: #{tpu_custom_call.1} parent=19 // pred_region
          %s210 = sand.u32 %s33, 1
          %s211 = scalar_lea.sflag [#allocation3], %s210
          %s212 = sand.u32 %s33, 1
          %s213 = smul.addr %s212, 8
          %s214 = scalar_lea.vmem [#allocation2], %s213
          %216 = vsyncadd %s211, 0
          %s217 = smul.addr %s23, 8
          %s218 = scalar_lea.hbm %s0, %s217
          %s220 = sshll.u32 %s218, 4
          %s221 = int_to_ptr.hbm [resolvable:$true] %s220
          %s222 = sshll.u32 %s214, 4
          %s223 = int_to_ptr.vmem [resolvable:$true] %s222
          %225 = dma.hbm_to_vmem [thread:$0]  %s221, 128, %s223, %s211
        $region24: #{tpu_custom_call.1} parent=19 // pred_fallthru
          _
        // Predicated region
        $region25: #{tpu_custom_call.1} parent=19 // pred_check
          %p226 = pneg %p69
        $region26: #{tpu_custom_call.1} parent=19 // pred_check_branch
          %228 = sbr.rel (%p226) target = $region28
        $region27: #{tpu_custom_call.1} parent=19 // pred_region
          %s229 = sand.u32 %s23, 1
          %s230 = scalar_lea.sflag [#allocation6], %s229
          %s231 = sand.u32 %s59, 1
          %s232 = smul.addr %s231, 8
          %s233 = scalar_lea.vmem [#allocation5], %s232
          %235 = vsyncadd %s230, 0
          %s236 = smul.addr %s23, 8
          %s237 = scalar_lea.hbm %s1, %s236
          %s239 = sshll.u32 %s237, 4
          %s240 = int_to_ptr.hbm [resolvable:$true] %s239
          %s241 = sshll.u32 %s233, 4
          %s242 = int_to_ptr.vmem [resolvable:$true] %s241
          %244 = dma.hbm_to_vmem [thread:$0]  %s240, 128, %s242, %s230
        $region28: #{tpu_custom_call.1} parent=19 // pred_fallthru
          _
        // Predicated region
        $region29: #{tpu_custom_call.1} parent=19 // pred_check
          %p245 = pneg %p95
        $region30: #{tpu_custom_call.1} parent=19 // pred_check_branch
          %247 = sbr.rel (%p245) target = $region32
        $region31: #{tpu_custom_call.1} parent=19 // pred_region
          %s248 = sand.u32 %s23, 1
          %s249 = scalar_lea.sflag [#allocation6], %s248
          %s250 = sand.u32 %s85, 1
          %s251 = smul.addr %s250, 8
          %s252 = scalar_lea.vmem [#allocation7], %s251
          %254 = vsyncadd %s249, 0
          %s255 = smul.addr %s23, 8
          %s256 = scalar_lea.hbm %s2, %s255
          %s258 = sshll.u32 %s256, 4
          %s259 = int_to_ptr.hbm [resolvable:$true] %s258
          %s260 = sshll.u32 %s252, 4
          %s261 = int_to_ptr.vmem [resolvable:$true] %s260
          %263 = dma.hbm_to_vmem [thread:$0]  %s259, 128, %s261, %s249
        $region32: #{tpu_custom_call.1} parent=19 // pred_fallthru
          _
        // Predicated region
        $region33: #{tpu_custom_call.1} parent=19 // pred_check
          %p264 = pneg %p121
        $region34: #{tpu_custom_call.1} parent=19 // pred_check_branch
          %266 = sbr.rel (%p264) target = $region36
        $region35: #{tpu_custom_call.1} parent=19 // pred_region
          %s267 = sand.u32 %s23, 1
          %s268 = scalar_lea.sflag [#allocation9], %s267
          %s269 = sand.u32 %s111, 1
          %s270 = smul.addr %s269, 8
          %s271 = scalar_lea.vmem [#allocation8], %s270
          %273 = vsyncadd %s268, 0
          %s274 = smul.addr %s23, 8
          %s275 = scalar_lea.hbm %s3, %s274
          %s277 = sshll.u32 %s275, 4
          %s278 = int_to_ptr.hbm [resolvable:$true] %s277
          %s279 = sshll.u32 %s271, 4
          %s280 = int_to_ptr.vmem [resolvable:$true] %s279
          %282 = dma.hbm_to_vmem [thread:$0]  %s278, 128, %s280, %s268
        $region36: #{tpu_custom_call.1} parent=19 // pred_fallthru
          _
      $region20: #{tpu_custom_call.1} parent=5 // pred_fallthru
        _
      %p283 = scmp.le.s32.totalorder 1, %s23
      %p284 = scmp.lt.s32.totalorder %s23, 3
      %p285 = pnand %p283, %p284
      %p286 = pneg %p285
      // Predicated region
      $region37: #{tpu_custom_call.1} parent=5 // pred_check
        _
      $region38: #{tpu_custom_call.1} parent=5 // pred_check_branch
        %288 = sbr.rel (%p285) target = $region40
      $region39: #{tpu_custom_call.1} parent=5 // pred_region
        %s289 = ssub.s32 %s23, 1
        %s290 = sand.u32 %s36, 1
        %s291 = scalar_lea.sflag [#allocation3], %s290
        %s292 = sand.u32 %s36, 1
        %s293 = smul.addr %s292, 8
        %s294 = scalar_lea.vmem [#allocation2], %s293
        // Predicated region
        $region41: #{tpu_custom_call.1} parent=39 // pred_check
          %p295 = pneg %p49
        $region42: #{tpu_custom_call.1} parent=39 // pred_check_branch
          %297 = sbr.rel (%p295) target = $region44
        $region43: #{tpu_custom_call.1} parent=39 // pred_region
          %299 = dma.done %s291, 128
        $region44: #{tpu_custom_call.1} parent=39 // pred_fallthru
          _
        %s300 = sand.u32 %s28, 1
        %s301 = scalar_lea.sflag [#allocation6], %s300
        %s302 = sand.u32 %s62, 1
        %s303 = smul.addr %s302, 8
        %s304 = scalar_lea.vmem [#allocation5], %s303
        // Predicated region
        $region45: #{tpu_custom_call.1} parent=39 // pred_check
          %p305 = pneg %p75
        $region46: #{tpu_custom_call.1} parent=39 // pred_check_branch
          %307 = sbr.rel (%p305) target = $region48
        $region47: #{tpu_custom_call.1} parent=39 // pred_region
          %309 = dma.done %s301, 128
        $region48: #{tpu_custom_call.1} parent=39 // pred_fallthru
          _
        %s310 = sand.u32 %s28, 1
        %s311 = scalar_lea.sflag [#allocation6], %s310
        %s312 = sand.u32 %s88, 1
        %s313 = smul.addr %s312, 8
        %s314 = scalar_lea.vmem [#allocation7], %s313
        // Predicated region
        $region49: #{tpu_custom_call.1} parent=39 // pred_check
          %p315 = pneg %p101
        $region50: #{tpu_custom_call.1} parent=39 // pred_check_branch
          %317 = sbr.rel (%p315) target = $region52
        $region51: #{tpu_custom_call.1} parent=39 // pred_region
          %319 = dma.done %s311, 128
        $region52: #{tpu_custom_call.1} parent=39 // pred_fallthru
          _
        %s320 = sand.u32 %s28, 1
        %s321 = scalar_lea.sflag [#allocation9], %s320
        %s322 = sand.u32 %s114, 1
        %s323 = smul.addr %s322, 8
        %s324 = scalar_lea.vmem [#allocation8], %s323
        // Predicated region
        $region53: #{tpu_custom_call.1} parent=39 // pred_check
          %p325 = pneg %p127
        $region54: #{tpu_custom_call.1} parent=39 // pred_check_branch
          %327 = sbr.rel (%p325) target = $region56
        $region55: #{tpu_custom_call.1} parent=39 // pred_region
          %329 = dma.done %s321, 128
        $region56: #{tpu_custom_call.1} parent=39 // pred_fallthru
          _
        // Predicated region
        $region57: #{tpu_custom_call.1} parent=39 // pred_check
          %p330 = pneg %p148
        $region58: #{tpu_custom_call.1} parent=39 // pred_check_branch
          %332 = sbr.rel (%p330) target = $region60
        $region59: #{tpu_custom_call.1} parent=39 // pred_region
          %334 = dma.done [#allocation9], 576
        $region60: #{tpu_custom_call.1} parent=39 // pred_fallthru
          _
        %s335 = sand.u32 %s36, 1
        %s336 = scalar_lea.sflag [#allocation3], %s335
        %s337 = sand.u32 %s36, 1
        %s338 = smul.addr %s337, 8
        %s339 = scalar_lea.vmem [#allocation2], %s338
        %p340 = pneg %p49
        %p341 = pneg %p46
        %s342 = sand.u32 %s28, 1
        %s343 = scalar_lea.sflag [#allocation6], %s342
        %s344 = sand.u32 %s62, 1
        %s345 = smul.addr %s344, 8
        %s346 = scalar_lea.vmem [#allocation5], %s345
        %p347 = pneg %p75
        %p348 = pneg %p72
        %s349 = sand.u32 %s28, 1
        %s350 = scalar_lea.sflag [#allocation6], %s349
        %s351 = sand.u32 %s88, 1
        %s352 = smul.addr %s351, 8
        %s353 = scalar_lea.vmem [#allocation7], %s352
        %p354 = pneg %p101
        %p355 = pneg %p98
        %s356 = sand.u32 %s28, 1
        %s357 = scalar_lea.sflag [#allocation9], %s356
        %s358 = sand.u32 %s114, 1
        %s359 = smul.addr %s358, 8
        %s360 = scalar_lea.vmem [#allocation8], %s359
        %p361 = pneg %p127
        %p362 = pneg %p124
        %p363 = pneg %p148
        %p364 = pneg %p145
        %p365 = pneg %p174
        %p366 = pneg %p171
        %s367 = sand.u32 %s161, 1
        %s368 = scalar_lea.sflag [#allocation4], %s367
        %s369 = sand.u32 %s161, 1
        %s370 = smul.addr %s369, 8
        %s371 = scalar_lea.vmem [#allocation11], %s370
        %v373 = vld [vmem:[%s324] sm:$0xff]
        %vm374 = vcmask 64512
        %v375 = vsel %vm374, %v373, 0.0
        %376 = vadd.xlane.f32.xlu0 %v375
        %v377 = vpop.xlane.xlu0 %376
        %v378 = vrsqrt.pop %v377
        %v379 = vmul.f32 %v378, %v377
        %v380 = vmul.f32 %v379, %v378
        %v381 = vmul.f32 0.5, %v380
        %v382 = vsub.f32 1.5, %v381
        %v383 = vmul.f32 %v378, %v382
        %vm384 = vweird.f32 %v377
        %vm385 = vweird.f32 %v378
        %vm386 = vmor %vm384, %vm385
        %v387 = vsel %vm386, %v378, %v383
        %v388 = vld [vmem:[%s294] sm:$0xff]
        %v389 = vld [vmem:[%s304] sm:$0xff]
        %v390 = vmul.f32 %v388, %v389
        %v391 = vld [vmem:[%s314] sm:$0xff]
        %v392 = vmul.f32 %v387, %v391
        %v393 = vpack.c.bf16 %v390, %v390
        %v394 = vpack.c.bf16 %v392, %v392
        %v396 = vsel %vm374, %v393, 0
        %vm398 = vcmask 1043456
        %v400 = vsel %vm398, %v394, 0
        %402 = vmatpush.bf16.msra.mxu0 0
        %403 = vmatpush.bf16.msra.mxu0 0
        %404 = vmatpush.bf16.msra.mxu0 0
        %405 = vmatpush.bf16.msra.mxu0 0
        %406 = vmatpush.bf16.msra.mxu0 0
        %407 = vmatpush.bf16.msra.mxu0 0
        %408 = vmatpush.bf16.msra.mxu0 0
        %409 = vmatpush.bf16.msra.mxu0 %v400
        %410 = vmatmul.bf16.gmra.mxu0 %v396
        %v411 = vpop.f32.mrf.mxu0
        %v412 = vadd.f32 0.0, %v411
        %v413 = vpop.f32.mrf.mxu0
        %414 = vdwg.mxu0
        %v415 = vmul.f32 %v387, %v412
        %v416 = vpack.c.bf16 %v415, %v415
        %v417 = vld [vmem:[#allocation10] sm:$0xf]
        %v418 = vld [vmem:[#allocation10 + $0x4] sm:$0xf]
        %v419 = vld [vmem:[#allocation10 + $0x8] sm:$0xf]
        %v420 = vld [vmem:[#allocation10 + $0xc] sm:$0xf]
        %v421 = vld [vmem:[#allocation10 + $0x10] sm:$0xf]
        %v422 = vld [vmem:[#allocation10 + $0x14] sm:$0xf]
        %v423 = vld [vmem:[#allocation10 + $0x18] sm:$0xf]
        %v424 = vld [vmem:[#allocation10 + $0x1c] sm:$0xf]
        %v425 = vld [vmem:[#allocation10 + $0x20] sm:$0x7]
        %v435 = vunpack.c.l.b16 %v417
        %v436 = vunpack.c.l.b16 %v418
        %v437 = vunpack.c.l.b16 %v419
        %v438 = vunpack.c.l.b16 %v420
        %v439 = vunpack.c.l.b16 %v421
        %v440 = vunpack.c.l.b16 %v422
        %v441 = vunpack.c.l.b16 %v423
        %v442 = vunpack.c.l.b16 %v424
        %v443 = vunpack.c.l.b16 %v425
        %v444 = vpack.c.b16 %v436, %v435
        %v445 = vpack.c.b16 %v438, %v437
        %v446 = vpack.c.b16 %v440, %v439
        %v447 = vpack.c.b16 %v442, %v441
        %v448 = vpack.c.b16 %v443, %v443
        %vm453 = vcmask 572416
        %v455 = vsel %vm453, %v416, 0
        %vm457 = vcmask 1042432
        %v459 = vsel %vm457, %v448, 0
        %461 = vmatpush.bf16.msra.mxu0 0
        %462 = vmatpush.bf16.msra.mxu0 0
        %463 = vmatpush.bf16.msra.mxu0 0
        %464 = vmatpush.bf16.msra.mxu0 %v459
        %465 = vmatpush.bf16.msra.mxu0 %v447
        %466 = vmatpush.bf16.msra.mxu0 %v446
        %467 = vmatpush.bf16.msra.mxu0 %v445
        %468 = vmatpush.bf16.msra.mxu0 %v444
        %469 = vmatmul.bf16.gmra.mxu0 %v455
        %v470 = vpop.f32.mrf.mxu0
        %v471 = vadd.f32 0.0, %v470
        %v472 = vpop.f32.mrf.mxu0
        %473 = vdwg.mxu0
        %v474 = vmax.f32 %v471, 0.0
        %475 = vst [vmem:[%s371] sm:$0xff] %v474
        %s476 = sand.u32 %s161, 1
        %s477 = scalar_lea.sflag [#allocation4], %s476
        %s478 = sand.u32 %s161, 1
        %s479 = smul.addr %s478, 8
        %s480 = scalar_lea.vmem [#allocation11], %s479
        // Predicated region
        $region61: #{tpu_custom_call.1} parent=39 // pred_check
          %p481 = pneg %p171
        $region62: #{tpu_custom_call.1} parent=39 // pred_check_branch
          %483 = sbr.rel (%p481) target = $region64
        $region63: #{tpu_custom_call.1} parent=39 // pred_region
          %485 = vsyncadd %s477, 0
          %s486 = smul.addr %s28, 8
          %s487 = scalar_lea.hbm %s5, %s486
          %s489 = sshll.u32 %s480, 4
          %s490 = int_to_ptr.vmem [resolvable:$true] %s489
          %s491 = sshll.u32 %s487, 4
          %s492 = int_to_ptr.hbm [resolvable:$true] %s491
          %494 = dma.vmem_to_hbm [thread:$0]  %s490, 128, %s492, %s477
        $region64: #{tpu_custom_call.1} parent=39 // pred_fallthru
          _
      $region40: #{tpu_custom_call.1} parent=5 // pred_fallthru
        _
      %p495 = scmp.le.s32.totalorder 2, %s23
      // Predicated region
      $region65: #{tpu_custom_call.1} parent=5 // pred_check
        %p496 = pneg %p495
      $region66: #{tpu_custom_call.1} parent=5 // pred_check_branch
        %498 = sbr.rel (%p496) target = $region68
      $region67: #{tpu_custom_call.1} parent=5 // pred_region
        %s499 = ssub.s32 %s23, 2
        // Predicated region
        $region69: #{tpu_custom_call.1} parent=67 // pred_check
          %p500 = pneg %p177
        $region70: #{tpu_custom_call.1} parent=67 // pred_check_branch
          %502 = sbr.rel (%p500) target = $region72
        $region71: #{tpu_custom_call.1} parent=67 // pred_region
          %s503 = sand.u32 %s162, 1
          %s504 = scalar_lea.sflag [#allocation4], %s503
          %s505 = sand.u32 %s162, 1
          %s506 = smul.addr %s505, 8
          %s507 = scalar_lea.vmem [#allocation11], %s506
          %509 = dma.done %s504, 128
        $region72: #{tpu_custom_call.1} parent=67 // pred_fallthru
          _
      $region68: #{tpu_custom_call.1} parent=5 // pred_fallthru
        _
    $region6: #{tpu_custom_call.1} parent=1 // loop_footer
      %s27 = sadd.s32 1, %s23
    $region7: #{tpu_custom_call.1} parent=1 // loop_footer_branch
      %22 = sbr.rel target = $region3
    $region8: #{tpu_custom_call.1} parent=1 // loop_exit
      _
    %510 = vsyncpa [#allocation3], 1
    %s511 = scalar_lea.sflag [#allocation3], 1
    %512 = vsyncpa %s511, 1
    %513 = vsyncpa [#allocation6], 1
    %s514 = scalar_lea.sflag [#allocation6], 1
    %515 = vsyncpa %s514, 1
    %516 = vsyncpa [#allocation9], 1
    %s517 = scalar_lea.sflag [#allocation9], 1
    %518 = vsyncpa %s517, 1
    %519 = vsyncpa [#allocation4], 1
    %s520 = scalar_lea.sflag [#allocation4], 1
    %521 = vsyncpa %s520, 1

</llo_original>
